<compile_context>
chip_gen: v7x
topology: tpu7x:2x2x1
jax: 0.10.0
libtpu: 0.0.40
codegen_flags: <defaults>
</compile_context>

<pallas_src>
import jax
import jax.numpy as jnp
from jax.experimental import pallas as pl
from jax.experimental.pallas import tpu as pltpu

EPS = 1e-5


def _make_plain_block_kernel(N, H, W, C):
    NH = N * H
    WC = W * C

    def kernel(p1_ref, t1_ref, t2_ref, g1_ref, b1_ref, g2_ref, b2_ref,
               pavg_ref, o_ref, mid_ref):
        """All refs are lane-dense VMEM blocks.

        p1_ref:   (NH, 3*(W+2)*Cin) bf16  im2col row-patches for conv1
        t1_ref:   (3*(W+2)*Cin, WC) bf16  block-Toeplitz conv1 weights
        t2_ref:   (3*WC, WC)        bf16  block-Toeplitz conv2 weights
        g*/b*:    (1, WC)           f32   gamma/beta pre-expanded to lanes
        pavg_ref: (WC, WC)          f32   per-channel averaging matrix (÷ N*H*W)
        o_ref:    (NH, WC)          f32   output (lane-dense)
        mid_ref:  (NH+16, WC)       f32   scratch with 8-row aligned halos
        """
        pavg = pavg_ref[...]

        def bn_relu(acc, g_l, b_l):
            # Training-mode batch stats, one-pass E[x^2]-mean^2 (f32), folded FMA.
            mean_l = jnp.dot(jnp.sum(acc, axis=0, keepdims=True), pavg,
                             preferred_element_type=jnp.float32)     # (1, WC)
            ex2_l = jnp.dot(jnp.sum(acc * acc, axis=0, keepdims=True), pavg,
                            preferred_element_type=jnp.float32)      # (1, WC)
            var_l = ex2_l - mean_l * mean_l
            scale_l = g_l * jax.lax.rsqrt(var_l + EPS)                # EUP rsqrt
            shift_l = b_l - mean_l * scale_l
            return jnp.maximum(acc * scale_l + shift_l, 0.0)          # 1 FMA + relu

        # ---- conv1: single MXU matmul, K = 3*(W+2)*Cin ---------------------
        acc1 = jnp.dot(p1_ref[...], t1_ref[...],
                       preferred_element_type=jnp.float32)            # (NH, WC) f32
        a1 = bn_relu(acc1, g1_ref[...], b1_ref[...])                   # (NH, WC) f32

        # ---- conv2 vertical taps via aligned scratch + iota masks ----------
        # Rows [8, 8+NH) hold a1 (aligned, unmasked store).  Halo rows are
        # never consumed un-masked, so no memset is needed.
        mid_ref[pl.ds(8, NH), :] = a1
        prev = mid_ref[pl.ds(7, NH), :]                                # a1[r-1]
        nxt = mid_ref[pl.ds(9, NH), :]                                 # a1[r+1]
        h = jax.lax.broadcasted_iota(jnp.int32, (NH, WC), 0) % H
        prev = jnp.where(h == 0, 0.0, prev)                            # top border / batch seam
        nxt = jnp.where(h == H - 1, 0.0, nxt)                          # bottom border / batch seam
        patch2 = jnp.concatenate([prev, a1, nxt],
                                 axis=-1).astype(jnp.bfloat16)         # (NH, 3*WC)

        # ---- conv2: single MXU matmul, K = 3*W*C ----------------------------
        acc2 = jnp.dot(patch2, t2_ref[...],
                       preferred_element_type=jnp.float32)             # (NH, WC) f32
        o_ref[...] = bn_relu(acc2, g2_ref[...], b2_ref[...])            # full-lane store

    return kernel


def _row_toeplitz(w_hwio, w_in, w_out, pad):
    """Block-Toeplitz weight so that a row-patch matmul equals the width-wise conv.

    T[dy*w_in*Ci + wi*Ci + ci, wo*Co + co] = w[dy, wi - wo + pad, ci, co]
    whenever 0 <= wi - wo + pad < kW, else 0.
    """
    kh, kw, ci, co = w_hwio.shape
    dx = jnp.arange(w_in)[:, None] - jnp.arange(w_out)[None, :] + pad    # (w_in, w_out)
    valid = (dx >= 0) & (dx < kw)
    wt = w_hwio[:, jnp.clip(dx, 0, kw - 1), :, :]                        # (kh, w_in, w_out, ci, co)
    wt = jnp.where(valid[None, :, :, None, None], wt, 0.0)
    return jnp.transpose(wt, (0, 1, 3, 2, 4)).reshape(kh * w_in * ci, w_out * co)


def plain_block_forward(x_nchw, w1_oihw, g1, b1, w2_oihw, g2, b2):
    """Wrapper: layout plumbing in plain JAX, all hot math inside the Pallas kernel."""
    N, Cin, H, W = x_nchw.shape
    C = w1_oihw.shape[0]
    NH, WC, Wp = N * H, W * C, W + 2

    # NHWC + spatial zero padding; im2col over rows: output row (n, h) reads
    # padded rows h, h+1, h+2 flattened over (width, channel).
    x_pad = jnp.pad(jnp.transpose(x_nchw, (0, 2, 3, 1)),
                    ((0, 0), (1, 1), (1, 1), (0, 0)))                    # (N, H+2, W+2, Cin)
    p1 = jnp.concatenate(
        [x_pad[:, d:d + H].reshape(NH, Wp * Cin) for d in range(3)],
        axis=-1).astype(jnp.bfloat16)                                    # (NH, 3*Wp*Cin)

    w1_hwio = jnp.transpose(w1_oihw, (2, 3, 1, 0))                       # (3,3,Cin,C)
    w2_hwio = jnp.transpose(w2_oihw, (2, 3, 1, 0))                       # (3,3,C,C)
    t1 = _row_toeplitz(w1_hwio, Wp, W, pad=0).astype(jnp.bfloat16)       # (3*Wp*Cin, WC)
    t2 = _row_toeplitz(w2_hwio, W, W, pad=1).astype(jnp.bfloat16)        # (3*WC, WC)

    # Per-channel averaging matrix in lane space: lane l belongs to channel l % C.
    lane_c = jnp.arange(WC) % C
    pavg = (lane_c[:, None] == lane_c[None, :]).astype(jnp.float32) / float(N * H * W)

    def lanes(v):  # (C,) -> (1, WC): lane w*C + c holds v[c]
        return jnp.tile(v.astype(jnp.float32), W).reshape(1, WC)

    vmem = pl.BlockSpec(memory_space=pltpu.MemorySpace.VMEM)
    out_flat = pl.pallas_call(
        _make_plain_block_kernel(N, H, W, C),
        out_shape=jax.ShapeDtypeStruct((NH, WC), jnp.float32),
        in_specs=[vmem] * 8,
        out_specs=vmem,
        scratch_shapes=[pltpu.VMEM((NH + 16, WC), jnp.float32)],
        compiler_params=pltpu.CompilerParams(vmem_limit_bytes=32 * 1024 * 1024),
    )(p1, t1, t2, lanes(g1), lanes(b1), lanes(g2), lanes(b2), pavg)

    # (NH, WC) == (N*H, W*C) -> (N, H, W, C) -> NCHW
    return jnp.transpose(out_flat.reshape(N, H, W, C), (0, 3, 1, 2))


def plain_block_reference(x, w1, g1, b1, w2, g2, b2):
    """Pure-JAX f32 reference mirroring PyTorch training-mode forward."""
    def conv(x, w):
        return jax.lax.conv_general_dilated(
            x, w, window_strides=(1, 1), padding=((1, 1), (1, 1)),
            dimension_numbers=('NCHW', 'OIHW', 'NCHW'))

    def bn_relu(x, g, b):
        mean = jnp.mean(x, axis=(0, 2, 3), keepdims=True)
        var = jnp.mean((x - mean) ** 2, axis=(0, 2, 3), keepdims=True)
        y = (x - mean) * jax.lax.rsqrt(var + EPS)
        y = y * g.reshape(1, -1, 1, 1) + b.reshape(1, -1, 1, 1)
        return jnp.maximum(y, 0.0)

    y = bn_relu(conv(x, w1), g1, b1)
    return bn_relu(conv(y, w2), g2, b2)


if __name__ == "__main__":
    # Small CIFAR-like shapes: batch=2, in_planes=4, planes=8, spatial=16 (W*C = 128).
    N, Cin, H, W = 2, 4, 16, 16
    planes = 8

    key = jax.random.PRNGKey(0)
    kx, kw1, kw2, kg1, kb1, kg2, kb2 = jax.random.split(key, 7)

    x = jax.random.normal(kx, (N, Cin, H, W), jnp.float32)
    w1 = jax.random.normal(kw1, (planes, Cin, 3, 3), jnp.float32) * 0.1
    w2 = jax.random.normal(kw2, (planes, planes, 3, 3), jnp.float32) * 0.1
    g1 = 1.0 + 0.1 * jax.random.normal(kg1, (planes,), jnp.float32)
    b1 = 0.1 * jax.random.normal(kb1, (planes,), jnp.float32)
    g2 = 1.0 + 0.1 * jax.random.normal(kg2, (planes,), jnp.float32)
    b2 = 0.1 * jax.random.normal(kb2, (planes,), jnp.float32)

    out = jax.block_until_ready(plain_block_forward(x, w1, g1, b1, w2, g2, b2))
    ref = jax.block_until_ready(plain_block_reference(x, w1, g1, b1, w2, g2, b2))

    assert out.shape == (N, planes, H, W)
    # Tolerance accounts for bf16 MXU operands (f32 accumulation, f32 BN math);
    # expected max deviation from the f32 reference is ~1e-2 on O(1) BN outputs.
    assert jnp.allclose(out, ref, atol=3e-2, rtol=3e-2), \
        f"max err {jnp.max(jnp.abs(out - ref))}"

    print("KERNEL_OK")
</pallas_src>

<mosaic_0001>
module attributes {stable_mosaic.version = 11 : i64} {
  func.func @kernel(%arg0: memref<32x216xbf16, #tpu.memory_space<vmem>>, %arg1: memref<216x128xbf16, #tpu.memory_space<vmem>>, %arg2: memref<384x128xbf16, #tpu.memory_space<vmem>>, %arg3: memref<1x128xf32, #tpu.memory_space<vmem>>, %arg4: memref<1x128xf32, #tpu.memory_space<vmem>>, %arg5: memref<1x128xf32, #tpu.memory_space<vmem>>, %arg6: memref<1x128xf32, #tpu.memory_space<vmem>>, %arg7: memref<128x128xf32, #tpu.memory_space<vmem>>, %arg8: memref<32x128xf32, #tpu.memory_space<vmem>>, %arg9: memref<48x128xf32, #tpu.memory_space<vmem>>) attributes {dimension_semantics = [], scalar_prefetch = 0 : i64, scratch_operands = 1 : i64, tpu.core_type = #tpu.core_type<tc>} {
    %c0 = arith.constant 0 : index
    %c0_0 = arith.constant 0 : index
    %0 = vector.load %arg7[%c0, %c0_0] : memref<128x128xf32, #tpu.memory_space<vmem>>, vector<128x128xf32>
    %c0_1 = arith.constant 0 : index
    %c0_2 = arith.constant 0 : index
    %1 = vector.load %arg0[%c0_1, %c0_2] : memref<32x216xbf16, #tpu.memory_space<vmem>>, vector<32x216xbf16>
    %c0_3 = arith.constant 0 : index
    %c0_4 = arith.constant 0 : index
    %2 = vector.load %arg1[%c0_3, %c0_4] : memref<216x128xbf16, #tpu.memory_space<vmem>>, vector<216x128xbf16>
    %cst = arith.constant dense<0.000000e+00> : vector<32x128xf32>
    %3 = tpu.matmul %1, %2, %cst {dimension_numbers = #tpu.dot_dimension_numbers<[1], [0], [0], [1], [0, 0, 1, 1], [], []>} : vector<32x216xbf16>, vector<216x128xbf16>, vector<32x128xf32> -> vector<32x128xf32>
    %c0_5 = arith.constant 0 : index
    %c0_6 = arith.constant 0 : index
    %4 = vector.load %arg3[%c0_5, %c0_6] : memref<1x128xf32, #tpu.memory_space<vmem>>, vector<1x128xf32>
    %c0_7 = arith.constant 0 : index
    %c0_8 = arith.constant 0 : index
    %5 = vector.load %arg4[%c0_7, %c0_8] : memref<1x128xf32, #tpu.memory_space<vmem>>, vector<1x128xf32>
    %cst_9 = arith.constant dense<0.000000e+00> : vector<128xf32>
    %6 = vector.multi_reduction <add>, %3, %cst_9 [0] : vector<32x128xf32> to vector<128xf32>
    %7 = vector.shape_cast %6 : vector<128xf32> to vector<1x128xf32>
    %cst_10 = arith.constant dense<0.000000e+00> : vector<1x128xf32>
    %8 = tpu.matmul %7, %0, %cst_10 {dimension_numbers = #tpu.dot_dimension_numbers<[1], [0], [0], [1], [0, 0, 1, 1], [], []>} : vector<1x128xf32>, vector<128x128xf32>, vector<1x128xf32> -> vector<1x128xf32>
    %9 = arith.mulf %3, %3 : vector<32x128xf32>
    %cst_11 = arith.constant dense<0.000000e+00> : vector<128xf32>
    %10 = vector.multi_reduction <add>, %9, %cst_11 [0] : vector<32x128xf32> to vector<128xf32>
    %11 = vector.shape_cast %10 : vector<128xf32> to vector<1x128xf32>
    %cst_12 = arith.constant dense<0.000000e+00> : vector<1x128xf32>
    %12 = tpu.matmul %11, %0, %cst_12 {dimension_numbers = #tpu.dot_dimension_numbers<[1], [0], [0], [1], [0, 0, 1, 1], [], []>} : vector<1x128xf32>, vector<128x128xf32>, vector<1x128xf32> -> vector<1x128xf32>
    %13 = arith.mulf %8, %8 : vector<1x128xf32>
    %14 = arith.subf %12, %13 : vector<1x128xf32>
    %cst_13 = arith.constant 9.99999974E-6 : f32
    %15 = vector.broadcast %cst_13 : f32 to vector<1x128xf32>
    %16 = arith.addf %14, %15 : vector<1x128xf32>
    %17 = math.rsqrt %16 : vector<1x128xf32>
    %18 = arith.mulf %4, %17 : vector<1x128xf32>
    %19 = arith.mulf %8, %18 : vector<1x128xf32>
    %20 = arith.subf %5, %19 : vector<1x128xf32>
    %21 = vector.broadcast %18 : vector<1x128xf32> to vector<32x128xf32>
    %22 = arith.mulf %3, %21 : vector<32x128xf32>
    %23 = vector.broadcast %20 : vector<1x128xf32> to vector<32x128xf32>
    %24 = arith.addf %22, %23 : vector<32x128xf32>
    %cst_14 = arith.constant 0.000000e+00 : f32
    %25 = vector.broadcast %cst_14 : f32 to vector<32x128xf32>
    %26 = arith.maximumf %24, %25 : vector<32x128xf32>
    %c8 = arith.constant 8 : index
    %c0_15 = arith.constant 0 : index
    %27 = vector.load %arg9[%c8, %c0_15] : memref<48x128xf32, #tpu.memory_space<vmem>>, vector<32x128xf32>
    tpu.vector_store %arg9[%c8, %c0_15], %26 {strides = array<i32>} : memref<48x128xf32, #tpu.memory_space<vmem>>, vector<32x128xf32>,
    %c7 = arith.constant 7 : index
    %c0_16 = arith.constant 0 : index
    %28 = vector.load %arg9[%c7, %c0_16] : memref<48x128xf32, #tpu.memory_space<vmem>>, vector<32x128xf32>
    %c9 = arith.constant 9 : index
    %c0_17 = arith.constant 0 : index
    %29 = vector.load %arg9[%c9, %c0_17] : memref<48x128xf32, #tpu.memory_space<vmem>>, vector<32x128xf32>
    %30 = tpu.iota {dimensions = array<i32: 0>} : vector<32x128xi32>
    %c16_i32 = arith.constant 16 : i32
    %c0_i32 = arith.constant 0 : i32
    %31 = arith.cmpi eq, %c16_i32, %c0_i32 : i32
    %c1_i32 = arith.constant 1 : i32
    %32 = arith.select %31, %c1_i32, %c16_i32 : i32
    %33 = vector.broadcast %32 : i32 to vector<32x128xi32>
    %34 = arith.remsi %30, %33 : vector<32x128xi32>
    %c0_i32_18 = arith.constant 0 : i32
    %35 = vector.broadcast %c0_i32_18 : i32 to vector<32x128xi32>
    %36 = arith.cmpi ne, %34, %35 : vector<32x128xi32>
    %c0_i32_19 = arith.constant 0 : i32
    %37 = vector.broadcast %c0_i32_19 : i32 to vector<32x128xi32>
    %38 = arith.cmpi slt, %34, %37 : vector<32x128xi32>
    %c0_i32_20 = arith.constant 0 : i32
    %39 = arith.cmpi slt, %32, %c0_i32_20 : i32
    %40 = vector.broadcast %39 : i1 to vector<32x128xi1>
    %41 = vector.broadcast %40 : vector<32x128xi1> to vector<32x128xi1>
    %42 = arith.xori %38, %41 : vector<32x128xi1>
    %43 = arith.andi %42, %36 : vector<32x128xi1>
    %44 = vector.broadcast %32 : i32 to vector<32x128xi32>
    %45 = arith.addi %34, %44 : vector<32x128xi32>
    %46 = arith.select %43, %45, %34 : vector<32x128xi1>, vector<32x128xi32>
    %c0_i32_21 = arith.constant 0 : i32
    %47 = vector.broadcast %c0_i32_21 : i32 to vector<32x128xi32>
    %48 = arith.cmpi eq, %46, %47 : vector<32x128xi32>
    %cst_22 = arith.constant 0.000000e+00 : f32
    %49 = vector.broadcast %cst_22 : f32 to vector<32x128xf32>
    %50 = arith.select %48, %49, %28 : vector<32x128xi1>, vector<32x128xf32>
    %c15_i32 = arith.constant 15 : i32
    %51 = vector.broadcast %c15_i32 : i32 to vector<32x128xi32>
    %52 = arith.cmpi eq, %46, %51 : vector<32x128xi32>
    %cst_23 = arith.constant 0.000000e+00 : f32
    %53 = vector.broadcast %cst_23 : f32 to vector<32x128xf32>
    %54 = arith.select %52, %53, %29 : vector<32x128xi1>, vector<32x128xf32>
    %55 = tpu.concatenate %50, %26, %54 in 1 : vector<32x128xf32>, vector<32x128xf32>, vector<32x128xf32> -> vector<32x384xf32>
    %56 = arith.truncf %55 : vector<32x384xf32> to vector<32x384xbf16>
    %c0_24 = arith.constant 0 : index
    %c0_25 = arith.constant 0 : index
    %57 = vector.load %arg2[%c0_24, %c0_25] : memref<384x128xbf16, #tpu.memory_space<vmem>>, vector<384x128xbf16>
    %cst_26 = arith.constant dense<0.000000e+00> : vector<32x128xf32>
    %58 = tpu.matmul %56, %57, %cst_26 {dimension_numbers = #tpu.dot_dimension_numbers<[1], [0], [0], [1], [0, 0, 1, 1], [], []>} : vector<32x384xbf16>, vector<384x128xbf16>, vector<32x128xf32> -> vector<32x128xf32>
    %c0_27 = arith.constant 0 : index
    %c0_28 = arith.constant 0 : index
    %59 = vector.load %arg5[%c0_27, %c0_28] : memref<1x128xf32, #tpu.memory_space<vmem>>, vector<1x128xf32>
    %c0_29 = arith.constant 0 : index
    %c0_30 = arith.constant 0 : index
    %60 = vector.load %arg6[%c0_29, %c0_30] : memref<1x128xf32, #tpu.memory_space<vmem>>, vector<1x128xf32>
    %cst_31 = arith.constant dense<0.000000e+00> : vector<128xf32>
    %61 = vector.multi_reduction <add>, %58, %cst_31 [0] : vector<32x128xf32> to vector<128xf32>
    %62 = vector.shape_cast %61 : vector<128xf32> to vector<1x128xf32>
    %cst_32 = arith.constant dense<0.000000e+00> : vector<1x128xf32>
    %63 = tpu.matmul %62, %0, %cst_32 {dimension_numbers = #tpu.dot_dimension_numbers<[1], [0], [0], [1], [0, 0, 1, 1], [], []>} : vector<1x128xf32>, vector<128x128xf32>, vector<1x128xf32> -> vector<1x128xf32>
    %64 = arith.mulf %58, %58 : vector<32x128xf32>
    %cst_33 = arith.constant dense<0.000000e+00> : vector<128xf32>
    %65 = vector.multi_reduction <add>, %64, %cst_33 [0] : vector<32x128xf32> to vector<128xf32>
    %66 = vector.shape_cast %65 : vector<128xf32> to vector<1x128xf32>
    %cst_34 = arith.constant dense<0.000000e+00> : vector<1x128xf32>
    %67 = tpu.matmul %66, %0, %cst_34 {dimension_numbers = #tpu.dot_dimension_numbers<[1], [0], [0], [1], [0, 0, 1, 1], [], []>} : vector<1x128xf32>, vector<128x128xf32>, vector<1x128xf32> -> vector<1x128xf32>
    %68 = arith.mulf %63, %63 : vector<1x128xf32>
    %69 = arith.subf %67, %68 : vector<1x128xf32>
    %cst_35 = arith.constant 9.99999974E-6 : f32
    %70 = vector.broadcast %cst_35 : f32 to vector<1x128xf32>
    %71 = arith.addf %69, %70 : vector<1x128xf32>
    %72 = math.rsqrt %71 : vector<1x128xf32>
    %73 = arith.mulf %59, %72 : vector<1x128xf32>
    %74 = arith.mulf %63, %73 : vector<1x128xf32>
    %75 = arith.subf %60, %74 : vector<1x128xf32>
    %76 = vector.broadcast %73 : vector<1x128xf32> to vector<32x128xf32>
    %77 = arith.mulf %58, %76 : vector<32x128xf32>
    %78 = vector.broadcast %75 : vector<1x128xf32> to vector<32x128xf32>
    %79 = arith.addf %77, %78 : vector<32x128xf32>
    %cst_36 = arith.constant 0.000000e+00 : f32
    %80 = vector.broadcast %cst_36 : f32 to vector<32x128xf32>
    %81 = arith.maximumf %79, %80 : vector<32x128xf32>
    %c0_37 = arith.constant 0 : index
    %c0_38 = arith.constant 0 : index
    %82 = vector.load %arg8[%c0_37, %c0_38] : memref<32x128xf32, #tpu.memory_space<vmem>>, vector<32x128xf32>
    tpu.vector_store %arg8[%c0_37, %c0_38], %81 {strides = array<i32>} : memref<32x128xf32, #tpu.memory_space<vmem>>, vector<32x128xf32>,
    return
  }
}

</mosaic_0001>

<llo_original>
// kernel: tpu_custom_call.1
$region0: #{tpu_custom_call.1}
  #allocation0 [shape = 'u32[]', space=smem, size = 0x4, offset = 0x4, fixed_abs, tag = 'smem constant byte address 0x4 - core index']
  #allocation1 [shape = 'u32[144,128]{1,0:T(1,128)}', space=vmem, size = 0x12000, scoped, tag = 'internal scratch']
  #allocation2 [shape = 'f32[48,128]{1,0:T(8,128)}', space=vmem, size = 0x6000, scoped, tag = 'scratch operand']
  %s0 = inlined_call_operand.hbm [shape: bf16[32,216], index: 0, kind: input, shape index: {}]
  %s1 = inlined_call_operand.hbm [shape: bf16[216,128], index: 1, kind: input, shape index: {}]
  %s2 = inlined_call_operand.hbm [shape: bf16[384,128], index: 2, kind: input, shape index: {}]
  %s3 = inlined_call_operand.vmem [shape: f32[1,128], index: 3, kind: input, shape index: {}]
  %s4 = inlined_call_operand.vmem [shape: f32[1,128], index: 4, kind: input, shape index: {}]
  %s5 = inlined_call_operand.vmem [shape: f32[1,128], index: 5, kind: input, shape index: {}]
  %s6 = inlined_call_operand.vmem [shape: f32[1,128], index: 6, kind: input, shape index: {}]
  %s7 = inlined_call_operand.hbm [shape: f32[128,128], index: 7, kind: input, shape index: {}]
  %s8 = inlined_call_operand.hbm [shape: f32[32,128], index: 8, kind: output, shape index: {}]
  %s9 = sld [smem:[#allocation0]]
  $region58: #{tpu_custom_call.1} parent=0
    _
  %s11 = ssub.s32 1, %s9
  %s12 = scalar_select 0, %s11, %s9
  $region1: #{tpu_custom_call.1} parent=0
    #allocation3 [shape = 'u8[16384]{0}', space=vmem, size = 0x4000, scoped, tag = 'input window, operand 0, single buffered']
    #allocation4 [shape = 's32[1]{0}', space=sflag, size = 0x4, scoped, tag = 'scoped memory for tpu_custom_call.1']
    #allocation5 [shape = 's32[1]{0}', space=sflag, size = 0x4, scoped, tag = 'scoped memory for tpu_custom_call.1']
    #allocation6 [shape = 'u8[55296]{0}', space=vmem, size = 0xd800, scoped, tag = 'input window, operand 1, single buffered']
    #allocation7 [shape = 's32[1]{0}', space=sflag, size = 0x4, scoped, tag = 'scoped memory for tpu_custom_call.1']
    #allocation8 [shape = 'u8[98304]{0}', space=vmem, size = 0x18000, scoped, tag = 'input window, operand 2, single buffered']
    #allocation9 [shape = 'u8[65536]{0}', space=vmem, size = 0x10000, scoped, tag = 'input window, operand 7, single buffered']
    #allocation10 [shape = 's32[1]{0}', space=sflag, size = 0x4, scoped, tag = 'scoped memory for tpu_custom_call.1']
    #allocation11 [shape = 'u8[16384]{0}', space=vmem, size = 0x4000, scoped, tag = 'output window, operand 0, single buffered']
    %13 = vsyncpa [#allocation4], 0
    %14 = vsyncpa [#allocation7], 0
    %15 = vsyncpa [#allocation10], 0
    %16 = vsyncpa [#allocation5], 0
    // Predicated region
    $region2: #{tpu_custom_call.1} parent=1 // pred_check
      _
    $region3: #{tpu_custom_call.1} parent=1 // pred_check_branch
      %18 = sbr.rel (0) target = $region5
    $region4: #{tpu_custom_call.1} parent=1 // pred_region
      %s20 = ssub.s32 512, 512
      %21 = vsyncadd [#allocation4], %s20
      %s22 = sshll.u32 [#allocation3], 4
      %s23 = int_to_ptr.vmem [resolvable:$true] %s22
      %28 = dma.hbm_to_vmem [thread:$0]  %s0, 512, %s23, [#allocation4], 128, 128, 8
    $region5: #{tpu_custom_call.1} parent=1 // pred_fallthru
      _
    // Predicated region
    $region6: #{tpu_custom_call.1} parent=1 // pred_check
      _
    $region7: #{tpu_custom_call.1} parent=1 // pred_check_branch
      %30 = sbr.rel (0) target = $region9
    $region8: #{tpu_custom_call.1} parent=1 // pred_region
      %s32 = ssub.s32 1728, 1728
      %33 = vsyncadd [#allocation7], %s32
      %s34 = sshll.u32 [#allocation6], 4
      %s35 = int_to_ptr.vmem [resolvable:$true] %s34
      %40 = dma.hbm_to_vmem [thread:$0]  %s1, 1728, %s35, [#allocation7], 64, 64, 4
    $region9: #{tpu_custom_call.1} parent=1 // pred_fallthru
      _
    // Predicated region
    $region10: #{tpu_custom_call.1} parent=1 // pred_check
      _
    $region11: #{tpu_custom_call.1} parent=1 // pred_check_branch
      %42 = sbr.rel (0) target = $region13
    $region12: #{tpu_custom_call.1} parent=1 // pred_region
      %s44 = ssub.s32 3072, 3072
      %45 = vsyncadd [#allocation7], %s44
      %s46 = sshll.u32 [#allocation8], 4
      %s47 = int_to_ptr.vmem [resolvable:$true] %s46
      %52 = dma.hbm_to_vmem [thread:$0]  %s2, 3072, %s47, [#allocation7], 64, 64, 4
    $region13: #{tpu_custom_call.1} parent=1 // pred_fallthru
      _
    // Predicated region
    $region14: #{tpu_custom_call.1} parent=1 // pred_check
      _
    $region15: #{tpu_custom_call.1} parent=1 // pred_check_branch
      %54 = sbr.rel (0) target = $region17
    $region16: #{tpu_custom_call.1} parent=1 // pred_region
      _
    $region17: #{tpu_custom_call.1} parent=1 // pred_fallthru
      _
    // Predicated region
    $region18: #{tpu_custom_call.1} parent=1 // pred_check
      _
    $region19: #{tpu_custom_call.1} parent=1 // pred_check_branch
      %56 = sbr.rel (0) target = $region21
    $region20: #{tpu_custom_call.1} parent=1 // pred_region
      _
    $region21: #{tpu_custom_call.1} parent=1 // pred_fallthru
      _
    // Predicated region
    $region22: #{tpu_custom_call.1} parent=1 // pred_check
      _
    $region23: #{tpu_custom_call.1} parent=1 // pred_check_branch
      %58 = sbr.rel (0) target = $region25
    $region24: #{tpu_custom_call.1} parent=1 // pred_region
      _
    $region25: #{tpu_custom_call.1} parent=1 // pred_fallthru
      _
    // Predicated region
    $region26: #{tpu_custom_call.1} parent=1 // pred_check
      _
    $region27: #{tpu_custom_call.1} parent=1 // pred_check_branch
      %60 = sbr.rel (0) target = $region29
    $region28: #{tpu_custom_call.1} parent=1 // pred_region
      _
    $region29: #{tpu_custom_call.1} parent=1 // pred_fallthru
      _
    // Predicated region
    $region30: #{tpu_custom_call.1} parent=1 // pred_check
      _
    $region31: #{tpu_custom_call.1} parent=1 // pred_check_branch
      %62 = sbr.rel (0) target = $region33
    $region32: #{tpu_custom_call.1} parent=1 // pred_region
      %s64 = ssub.s32 2048, 2048
      %65 = vsyncadd [#allocation10], %s64
      %s66 = sshll.u32 [#allocation9], 4
      %s67 = int_to_ptr.vmem [resolvable:$true] %s66
      %72 = dma.hbm_to_vmem [thread:$0]  %s7, 2048, %s67, [#allocation10], 128, 128, 8
    $region33: #{tpu_custom_call.1} parent=1 // pred_fallthru
      _
    // Predicated region
    $region34: #{tpu_custom_call.1} parent=1 // pred_check
      _
    $region35: #{tpu_custom_call.1} parent=1 // pred_check_branch
      %74 = sbr.rel (0) target = $region37
    $region36: #{tpu_custom_call.1} parent=1 // pred_region
      %75 = dma.done [#allocation4], 512
    $region37: #{tpu_custom_call.1} parent=1 // pred_fallthru
      _
    // Predicated region
    $region38: #{tpu_custom_call.1} parent=1 // pred_check
      _
    $region39: #{tpu_custom_call.1} parent=1 // pred_check_branch
      %77 = sbr.rel (0) target = $region41
    $region40: #{tpu_custom_call.1} parent=1 // pred_region
      %78 = dma.done [#allocation7], 1728
    $region41: #{tpu_custom_call.1} parent=1 // pred_fallthru
      _
    // Predicated region
    $region42: #{tpu_custom_call.1} parent=1 // pred_check
      _
    $region43: #{tpu_custom_call.1} parent=1 // pred_check_branch
      %80 = sbr.rel (0) target = $region45
    $region44: #{tpu_custom_call.1} parent=1 // pred_region
      %81 = dma.done [#allocation7], 3072
    $region45: #{tpu_custom_call.1} parent=1 // pred_fallthru
      _
    // Predicated region
    $region46: #{tpu_custom_call.1} parent=1 // pred_check
      _
    $region47: #{tpu_custom_call.1} parent=1 // pred_check_branch
      %83 = sbr.rel (0) target = $region49
    $region48: #{tpu_custom_call.1} parent=1 // pred_region
      %84 = dma.done [#allocation10], 2048
    $region49: #{tpu_custom_call.1} parent=1 // pred_fallthru
      _
    %v86 = vld [vmem:[#allocation9] sm:$0xff]
    %v87 = vld [vmem:[#allocation9 + $0x8] sm:$0xff]
    %v88 = vld [vmem:[#allocation9 + $0x10] sm:$0xff]
    %v89 = vld [vmem:[#allocation9 + $0x18] sm:$0xff]
    %v90 = vld [vmem:[#allocation9 + $0x20] sm:$0xff]
    %v91 = vld [vmem:[#allocation9 + $0x28] sm:$0xff]
    %v92 = vld [vmem:[#allocation9 + $0x30] sm:$0xff]
    %v93 = vld [vmem:[#allocation9 + $0x38] sm:$0xff]
    %v94 = vld [vmem:[#allocation9 + $0x40] sm:$0xff]
    %v95 = vld [vmem:[#allocation9 + $0x48] sm:$0xff]
    %v96 = vld [vmem:[#allocation9 + $0x50] sm:$0xff]
    %v97 = vld [vmem:[#allocation9 + $0x58] sm:$0xff]
    %v98 = vld [vmem:[#allocation9 + $0x60] sm:$0xff]
    %v99 = vld [vmem:[#allocation9 + $0x68] sm:$0xff]
    %v100 = vld [vmem:[#allocation9 + $0x70] sm:$0xff]
    %v101 = vld [vmem:[#allocation9 + $0x78] sm:$0xff]
    %v102 = vld [vmem:[#allocation3] sm:$0xff]
    %v103 = vld [vmem:[#allocation3 + $0x8] sm:$0xff]
    %v104 = vld [vmem:[#allocation3 + $0x10] sm:$0xff]
    %v105 = vld [vmem:[#allocation3 + $0x18] sm:$0xff]
    %v106 = vld [vmem:[#allocation6] sm:$0xf]
    %v107 = vld [vmem:[#allocation6 + $0x4] sm:$0xf]
    %v108 = vld [vmem:[#allocation6 + $0x8] sm:$0xf]
    %v109 = vld [vmem:[#allocation6 + $0xc] sm:$0xf]
    %v110 = vld [vmem:[#allocation6 + $0x10] sm:$0xf]
    %v111 = vld [vmem:[#allocation6 + $0x14] sm:$0xf]
    %v112 = vld [vmem:[#allocation6 + $0x18] sm:$0xf]
    %v113 = vld [vmem:[#allocation6 + $0x1c] sm:$0xf]
    %v114 = vld [vmem:[#allocation6 + $0x20] sm:$0xf]
    %v115 = vld [vmem:[#allocation6 + $0x24] sm:$0xf]
    %v116 = vld [vmem:[#allocation6 + $0x28] sm:$0xf]
    %v117 = vld [vmem:[#allocation6 + $0x2c] sm:$0xf]
    %v118 = vld [vmem:[#allocation6 + $0x30] sm:$0xf]
    %v119 = vld [vmem:[#allocation6 + $0x34] sm:$0xf]
    %v120 = vld [vmem:[#allocation6 + $0x38] sm:$0xf]
    %v121 = vld [vmem:[#allocation6 + $0x3c] sm:$0xf]
    %v122 = vld [vmem:[#allocation6 + $0x40] sm:$0xf]
    %v123 = vld [vmem:[#allocation6 + $0x44] sm:$0xf]
    %v124 = vld [vmem:[#allocation6 + $0x48] sm:$0xf]
    %v125 = vld [vmem:[#allocation6 + $0x4c] sm:$0xf]
    %v126 = vld [vmem:[#allocation6 + $0x50] sm:$0xf]
    %v127 = vld [vmem:[#allocation6 + $0x54] sm:$0xf]
    %v128 = vld [vmem:[#allocation6 + $0x58] sm:$0xf]
    %v129 = vld [vmem:[#allocation6 + $0x5c] sm:$0xf]
    %v130 = vld [vmem:[#allocation6 + $0x60] sm:$0xf]
    %v131 = vld [vmem:[#allocation6 + $0x64] sm:$0xf]
    %v132 = vld [vmem:[#allocation6 + $0x68] sm:$0xf]
    %v137 = vunpack.c.l.b16 %v102
    %v138 = vunpack.c.h.b16 %v102
    %v139 = vunpack.c.l.b16 %v103
    %v140 = vunpack.c.h.b16 %v103
    %v141 = vunpack.c.l.b16 %v104
    %v142 = vunpack.c.h.b16 %v104
    %v143 = vunpack.c.l.b16 %v105
    %v144 = vunpack.c.h.b16 %v105
    %v145 = vpack.c.b16 %v139, %v137
    %v146 = vpack.c.b16 %v140, %v138
    %v147 = vpack.c.b16 %v143, %v141
    %v148 = vpack.c.b16 %v144, %v142
    %v178 = vunpack.c.l.b16 %v106
    %v179 = vunpack.c.l.b16 %v107
    %v180 = vunpack.c.l.b16 %v108
    %v181 = vunpack.c.l.b16 %v109
    %v182 = vunpack.c.l.b16 %v110
    %v183 = vunpack.c.l.b16 %v111
    %v184 = vunpack.c.l.b16 %v112
    %v185 = vunpack.c.l.b16 %v113
    %v186 = vunpack.c.l.b16 %v114
    %v187 = vunpack.c.l.b16 %v115
    %v188 = vunpack.c.l.b16 %v116
    %v189 = vunpack.c.l.b16 %v117
    %v190 = vunpack.c.l.b16 %v118
    %v191 = vunpack.c.l.b16 %v119
    %v192 = vunpack.c.l.b16 %v120
    %v193 = vunpack.c.l.b16 %v121
    %v194 = vunpack.c.l.b16 %v122
    %v195 = vunpack.c.l.b16 %v123
    %v196 = vunpack.c.l.b16 %v124
    %v197 = vunpack.c.l.b16 %v125
    %v198 = vunpack.c.l.b16 %v126
    %v199 = vunpack.c.l.b16 %v127
    %v200 = vunpack.c.l.b16 %v128
    %v201 = vunpack.c.l.b16 %v129
    %v202 = vunpack.c.l.b16 %v130
    %v203 = vunpack.c.l.b16 %v131
    %v204 = vunpack.c.l.b16 %v132
    %v205 = vpack.c.b16 %v179, %v178
    %v206 = vpack.c.b16 %v181, %v180
    %v207 = vpack.c.b16 %v183, %v182
    %v208 = vpack.c.b16 %v185, %v184
    %v209 = vpack.c.b16 %v187, %v186
    %v210 = vpack.c.b16 %v189, %v188
    %v211 = vpack.c.b16 %v191, %v190
    %v212 = vpack.c.b16 %v193, %v192
    %v213 = vpack.c.b16 %v195, %v194
    %v214 = vpack.c.b16 %v197, %v196
    %v215 = vpack.c.b16 %v199, %v198
    %v216 = vpack.c.b16 %v201, %v200
    %v217 = vpack.c.b16 %v203, %v202
    %v218 = vpack.c.b16 %v204, %v204
    %vm232 = vcmask 719872
    %v234 = vsel %vm232, %v146, 0
    %v237 = vsel %vm232, %v148, 0
    %vm239 = vcmask 1043456
    %v241 = vsel %vm239, %v218, 0
    %243 = vmatprep.subr.bf16.mxu0 0
    %244 = vmatpush1.bf16.msra.mxu0 %v205
    %245 = vmatprep.subr.bf16.mxu0 0
    %246 = vmatpush1.bf16.msra.mxu0 %v206
    %247 = vmatprep.subr.bf16.mxu0 0
    %248 = vmatpush1.bf16.msra.mxu0 %v207
    %249 = vmatprep.subr.bf16.mxu0 0
    %250 = vmatpush1.bf16.msra.mxu0 %v208
    %251 = vmatprep.subr.bf16.mxu0 0
    %252 = vmatpush1.bf16.msra.mxu0 %v209
    %253 = vmatprep.subr.bf16.mxu0 0
    %254 = vmatpush1.bf16.msra.mxu0 %v210
    %255 = vmatprep.subr.bf16.mxu0 0
    %256 = vmatpush1.bf16.msra.mxu0 %v211
    %257 = vmatprep.subr.bf16.mxu0 0
    %258 = vmatpush1.bf16.msra.mxu0 %v212
    %259 = vmatprep.subr.bf16.mxu0 0
    %260 = vmatpush1.bf16.msra.mxu0 %v213
    %261 = vmatprep.subr.bf16.mxu0 0
    %262 = vmatpush1.bf16.msra.mxu0 %v214
    %263 = vmatprep.subr.bf16.mxu0 0
    %264 = vmatpush1.bf16.msra.mxu0 %v215
    %265 = vmatprep.subr.bf16.mxu0 0
    %266 = vmatpush1.bf16.msra.mxu0 %v216
    %267 = vmatprep.subr.bf16.mxu0 0
    %268 = vmatpush1.bf16.msra.mxu0 %v217
    %269 = vmatprep.subr.bf16.mxu0 0
    %270 = vmatpush1.bf16.msra.mxu0 %v241
    %271 = vmatprep.subr.bf16.mxu0 0
    %272 = vmatpush1.bf16.msra.mxu0 0
    %273 = vmatprep.subr.bf16.mxu0 0
    %274 = vmatpush1.bf16.msra.mxu0 0
    %275 = vmatprep.mubr.bf16.mxu0 %v234
    %276 = vmatmul.mubr.bf16.gmra.mrb[0].mxu0 %v145
    %v277 = vpop.f32.mrb[0].mxu0
    %v278 = vadd.f32 0.0, %v277
    %v279 = vpop.f32.mrb[0].mxu0
    %v280 = vpop.f32.mrb[0].mxu0
    %v281 = vadd.f32 0.0, %v280
    %v282 = vpop.f32.mrb[0].mxu0
    %283 = vmatprep.mubr.bf16.mxu0 %v237
    %284 = vmatmul.mubr.bf16.gmra.mrb[0].mxu0 %v147
    %v285 = vpop.f32.mrb[0].mxu0
    %v286 = vadd.f32 0.0, %v285
    %v287 = vpop.f32.mrb[0].mxu0
    %v288 = vpop.f32.mrb[0].mxu0
    %v289 = vadd.f32 0.0, %v288
    %v290 = vpop.f32.mrb[0].mxu0
    %291 = vdwg.mxu0
    %v292 = vld [vmem:[%s3] sm:$0x1]
    %v293 = vld [vmem:[%s4] sm:$0x1]
    %v294 = vadd.f32 %v278, %v281
    %v295 = vadd.f32 %v294, %v286
    %v296 = vadd.f32 %v295, %v289
    %v297 = vrot.slane %v296, 4
    %v298 = vadd.f32 %v296, %v297
    %v299 = vrot.slane %v298, 2
    %v300 = vadd.f32 %v298, %v299
    %v301 = vrot.slane %v300, 1
    %v302 = vadd.f32 %v300, %v301
    %303 = vmatprep.subr.mxu0 0.0
    %304 = vmatpush1.msra.mxu0 %v86
    %305 = vmatprep.subr.mxu0 0.0
    %306 = vmatpush1.msra.mxu0 %v87
    %307 = vmatprep.subr.mxu0 0.0
    %308 = vmatpush1.msra.mxu0 %v88
    %309 = vmatprep.subr.mxu0 0.0
    %310 = vmatpush1.msra.mxu0 %v89
    %311 = vmatprep.subr.mxu0 0.0
    %312 = vmatpush1.msra.mxu0 %v90
    %313 = vmatprep.subr.mxu0 0.0
    %314 = vmatpush1.msra.mxu0 %v91
    %315 = vmatprep.subr.mxu0 0.0
    %316 = vmatpush1.msra.mxu0 %v92
    %317 = vmatprep.subr.mxu0 0.0
    %318 = vmatpush1.msra.mxu0 %v93
    %319 = vmatprep.subr.mxu0 0.0
    %320 = vmatpush1.msra.mxu0 %v94
    %321 = vmatprep.subr.mxu0 0.0
    %322 = vmatpush1.msra.mxu0 %v95
    %323 = vmatprep.subr.mxu0 0.0
    %324 = vmatpush1.msra.mxu0 %v96
    %325 = vmatprep.subr.mxu0 0.0
    %326 = vmatpush1.msra.mxu0 %v97
    %327 = vmatprep.subr.mxu0 0.0
    %328 = vmatpush1.msra.mxu0 %v98
    %329 = vmatprep.subr.mxu0 0.0
    %330 = vmatpush1.msra.mxu0 %v99
    %331 = vmatprep.subr.mxu0 0.0
    %332 = vmatpush1.msra.mxu0 %v100
    %333 = vmatprep.subr.mxu0 0.0
    %334 = vmatpush1.msra.mxu0 %v101
    %335 = vmatprep.subr.mxu0 0.0
    %336 = vmatpush1.msra.mxu0 0.0
    %337 = vmatprep.subr.mxu0 0.0
    %338 = vmatpush1.msra.mxu0 0.0
    %339 = vmatprep.subr.mxu0 0.0
    %340 = vmatpush1.msra.mxu0 0.0
    %341 = vmatprep.subr.mxu0 0.0
    %342 = vmatpush1.msra.mxu0 0.0
    %343 = vmatprep.subr.mxu0 0.0
    %344 = vmatpush1.msra.mxu0 0.0
    %345 = vmatprep.subr.mxu0 0.0
    %346 = vmatpush1.msra.mxu0 0.0
    %347 = vmatprep.subr.mxu0 0.0
    %348 = vmatpush1.msra.mxu0 0.0
    %349 = vmatprep.subr.mxu0 0.0
    %350 = vmatpush1.msra.mxu0 0.0
    %351 = vmatprep.subr.mxu0 0.0
    %352 = vmatpush1.msra.mxu0 0.0
    %353 = vmatprep.subr.mxu0 0.0
    %354 = vmatpush1.msra.mxu0 0.0
    %355 = vmatprep.subr.mxu0 0.0
    %356 = vmatpush1.msra.mxu0 0.0
    %357 = vmatprep.subr.mxu0 0.0
    %358 = vmatpush1.msra.mxu0 0.0
    %359 = vmatprep.subr.mxu0 0.0
    %360 = vmatpush1.msra.mxu0 0.0
    %361 = vmatprep.subr.mxu0 0.0
    %362 = vmatpush1.msra.mxu0 0.0
    %363 = vmatprep.subr.mxu0 0.0
    %364 = vmatpush1.msra.mxu0 0.0
    %365 = vmatprep.subr.mxu0 0.0
    %366 = vmatpush1.msra.mxu0 0.0
    %367 = vmatprep.mubr.f32.mxu0 0.0
    %368 = vmatmul.mubr.f32.gmra.mrb[0].mxu0 %v302
    %v369 = vpop.f32.mrb[0].mxu0
    %v370 = vadd.f32 0.0, %v369
    %v371 = vpop.f32.mrb[0].mxu0
    %372 = vdwg.mxu0
    %v373 = vmul.f32 %v278, %v278
    %v374 = vmul.f32 %v281, %v281
    %v375 = vmul.f32 %v286, %v286
    %v376 = vmul.f32 %v289, %v289
    %v377 = vadd.f32 %v373, %v374
    %v378 = vadd.f32 %v377, %v375
    %v379 = vadd.f32 %v378, %v376
    %v380 = vrot.slane %v379, 4
    %v381 = vadd.f32 %v379, %v380
    %v382 = vrot.slane %v381, 2
    %v383 = vadd.f32 %v381, %v382
    %v384 = vrot.slane %v383, 1
    %v385 = vadd.f32 %v383, %v384
    %386 = vmatprep.subr.mxu0 0.0
    %387 = vmatpush1.msra.mxu0 %v86
    %388 = vmatprep.subr.mxu0 0.0
    %389 = vmatpush1.msra.mxu0 %v87
    %390 = vmatprep.subr.mxu0 0.0
    %391 = vmatpush1.msra.mxu0 %v88
    %392 = vmatprep.subr.mxu0 0.0
    %393 = vmatpush1.msra.mxu0 %v89
    %394 = vmatprep.subr.mxu0 0.0
    %395 = vmatpush1.msra.mxu0 %v90
    %396 = vmatprep.subr.mxu0 0.0
    %397 = vmatpush1.msra.mxu0 %v91
    %398 = vmatprep.subr.mxu0 0.0
    %399 = vmatpush1.msra.mxu0 %v92
    %400 = vmatprep.subr.mxu0 0.0
    %401 = vmatpush1.msra.mxu0 %v93
    %402 = vmatprep.subr.mxu0 0.0
    %403 = vmatpush1.msra.mxu0 %v94
    %404 = vmatprep.subr.mxu0 0.0
    %405 = vmatpush1.msra.mxu0 %v95
    %406 = vmatprep.subr.mxu0 0.0
    %407 = vmatpush1.msra.mxu0 %v96
    %408 = vmatprep.subr.mxu0 0.0
    %409 = vmatpush1.msra.mxu0 %v97
    %410 = vmatprep.subr.mxu0 0.0
    %411 = vmatpush1.msra.mxu0 %v98
    %412 = vmatprep.subr.mxu0 0.0
    %413 = vmatpush1.msra.mxu0 %v99
    %414 = vmatprep.subr.mxu0 0.0
    %415 = vmatpush1.msra.mxu0 %v100
    %416 = vmatprep.subr.mxu0 0.0
    %417 = vmatpush1.msra.mxu0 %v101
    %418 = vmatprep.subr.mxu0 0.0
    %419 = vmatpush1.msra.mxu0 0.0
    %420 = vmatprep.subr.mxu0 0.0
    %421 = vmatpush1.msra.mxu0 0.0
    %422 = vmatprep.subr.mxu0 0.0
    %423 = vmatpush1.msra.mxu0 0.0
    %424 = vmatprep.subr.mxu0 0.0
    %425 = vmatpush1.msra.mxu0 0.0
    %426 = vmatprep.subr.mxu0 0.0
    %427 = vmatpush1.msra.mxu0 0.0
    %428 = vmatprep.subr.mxu0 0.0
    %429 = vmatpush1.msra.mxu0 0.0
    %430 = vmatprep.subr.mxu0 0.0
    %431 = vmatpush1.msra.mxu0 0.0
    %432 = vmatprep.subr.mxu0 0.0
    %433 = vmatpush1.msra.mxu0 0.0
    %434 = vmatprep.subr.mxu0 0.0
    %435 = vmatpush1.msra.mxu0 0.0
    %436 = vmatprep.subr.mxu0 0.0
    %437 = vmatpush1.msra.mxu0 0.0
    %438 = vmatprep.subr.mxu0 0.0
    %439 = vmatpush1.msra.mxu0 0.0
    %440 = vmatprep.subr.mxu0 0.0
    %441 = vmatpush1.msra.mxu0 0.0
    %442 = vmatprep.subr.mxu0 0.0
    %443 = vmatpush1.msra.mxu0 0.0
    %444 = vmatprep.subr.mxu0 0.0
    %445 = vmatpush1.msra.mxu0 0.0
    %446 = vmatprep.subr.mxu0 0.0
    %447 = vmatpush1.msra.mxu0 0.0
    %448 = vmatprep.subr.mxu0 0.0
    %449 = vmatpush1.msra.mxu0 0.0
    %450 = vmatprep.mubr.f32.mxu0 0.0
    %451 = vmatmul.mubr.f32.gmra.mrb[0].mxu0 %v385
    %v452 = vpop.f32.mrb[0].mxu0
    %v453 = vadd.f32 0.0, %v452
    %v454 = vpop.f32.mrb[0].mxu0
    %455 = vdwg.mxu0
    %v456 = vmul.f32 %v370, %v370
    %v457 = vsub.f32 %v453, %v456
    %v458 = vadd.f32 %v457, 1e-05
    %v459 = vrsqrt.pop %v458
    %v460 = vmul.f32 %v292, %v459
    %v461 = vmul.f32 %v370, %v460
    %v462 = vsub.f32 %v293, %v461
    %v464 = vlaneseq
    %v465 = vshrl.u32 %v464, 7
    %v466 = vsub.s32 0, %v465
    %v467 = vrot.slane %v460, %v466
    %v469 = vmul.f32 %v278, %v467
    %v470 = vmul.f32 %v281, %v467
    %v471 = vmul.f32 %v286, %v467
    %v472 = vmul.f32 %v289, %v467
    %v474 = vlaneseq
    %v475 = vshrl.u32 %v474, 7
    %v476 = vsub.s32 0, %v475
    %v477 = vrot.slane %v462, %v476
    %v479 = vadd.f32 %v469, %v477
    %v480 = vadd.f32 %v470, %v477
    %v481 = vadd.f32 %v471, %v477
    %v482 = vadd.f32 %v472, %v477
    %v483 = vmax.f32 %v479, 0.0
    %v484 = vmax.f32 %v480, 0.0
    %v485 = vmax.f32 %v481, 0.0
    %v486 = vmax.f32 %v482, 0.0
    %487 = vst [vmem:[#allocation2 + $0x8] sm:$0xff] %v483
    %488 = vst [vmem:[#allocation2 + $0x10] sm:$0xff] %v484
    %489 = vst [vmem:[#allocation2 + $0x18] sm:$0xff] %v485
    %490 = vst [vmem:[#allocation2 + $0x20] sm:$0xff] %v486
    %v491 = vld [vmem:[#allocation2 + $0x7] sm:$0xff]
    %v492 = vld [vmem:[#allocation2 + $0xf] sm:$0xff]
    %v493 = vld [vmem:[#allocation2 + $0x17] sm:$0xff]
    %v494 = vld [vmem:[#allocation2 + $0x1f] sm:$0xff]
    %v495 = vld [vmem:[#allocation2 + $0x9] sm:$0xff]
    %v496 = vld [vmem:[#allocation2 + $0x11] sm:$0xff]
    %v497 = vld [vmem:[#allocation2 + $0x19] sm:$0xff]
    %v498 = vld [vmem:[#allocation2 + $0x21] sm:$0xff]
    %v499 = vlaneseq
    %v500 = vshrl.u32 %v499, 7
    %v501 = vadd.s32 %v500, 8
    %v502 = vadd.s32 %v500, 16
    %v503 = vadd.s32 %v500, 24
    %vm504 = vcmp.lt.s32.totalorder %v500, 0
    %v505 = vsub.s32 0, %v500
    %v506 = vsel %vm504, %v505, %v500
    %v507 = vshrl.u32 %v506, 4
    %v508 = vand.u32 %v506, 15
    %v509 = vsub.s32 0, %v508
    %v510 = vsel %vm504, %v509, %v508
    %vm511 = vcmp.lt.s32.totalorder %v501, 0
    %v512 = vsub.s32 0, %v501
    %v513 = vsel %vm511, %v512, %v501
    %v514 = vshrl.u32 %v513, 4
    %v515 = vand.u32 %v513, 15
    %v516 = vsub.s32 0, %v515
    %v517 = vsel %vm511, %v516, %v515
    %vm518 = vcmp.lt.s32.totalorder %v502, 0
    %v519 = vsub.s32 0, %v502
    %v520 = vsel %vm518, %v519, %v502
    %v521 = vshrl.u32 %v520, 4
    %v522 = vand.u32 %v520, 15
    %v523 = vsub.s32 0, %v522
    %v524 = vsel %vm518, %v523, %v522
    %vm525 = vcmp.lt.s32.totalorder %v503, 0
    %v526 = vsub.s32 0, %v503
    %v527 = vsel %vm525, %v526, %v503
    %v528 = vshrl.u32 %v527, 4
    %v529 = vand.u32 %v527, 15
    %v530 = vsub.s32 0, %v529
    %v531 = vsel %vm525, %v530, %v529
    %vm532 = vcmp.ne.s32.totalorder %v510, 0
    %vm533 = vcmp.ne.s32.totalorder %v517, 0
    %vm534 = vcmp.ne.s32.totalorder %v524, 0
    %vm535 = vcmp.ne.s32.totalorder %v531, 0
    %vm536 = vcmp.lt.s32.totalorder %v510, 0
    %vm537 = vcmp.lt.s32.totalorder %v517, 0
    %vm538 = vcmp.lt.s32.totalorder %v524, 0
    %vm539 = vcmp.lt.s32.totalorder %v531, 0
    %vm540 = vmand %vm536, %vm532
    %vm541 = vmand %vm537, %vm533
    %vm542 = vmand %vm538, %vm534
    %vm543 = vmand %vm539, %vm535
    %v544 = vadd.s32 %v510, 16
    %v545 = vadd.s32 %v517, 16
    %v546 = vadd.s32 %v524, 16
    %v547 = vadd.s32 %v531, 16
    %v548 = vsel %vm540, %v544, %v510
    %v549 = vsel %vm541, %v545, %v517
    %v550 = vsel %vm542, %v546, %v524
    %v551 = vsel %vm543, %v547, %v531
    %vm552 = vcmp.eq.s32.totalorder %v548, 0
    %vm553 = vcmp.eq.s32.totalorder %v549, 0
    %vm554 = vcmp.eq.s32.totalorder %v550, 0
    %vm555 = vcmp.eq.s32.totalorder %v551, 0
    %v556 = vsel %vm552, 0.0, %v491
    %v557 = vsel %vm553, 0.0, %v492
    %v558 = vsel %vm554, 0.0, %v493
    %v559 = vsel %vm555, 0.0, %v494
    %vm560 = vcmp.eq.s32.totalorder %v548, 15
    %vm561 = vcmp.eq.s32.totalorder %v549, 15
    %vm562 = vcmp.eq.s32.totalorder %v550, 15
    %vm563 = vcmp.eq.s32.totalorder %v551, 15
    %v564 = vsel %vm560, 0.0, %v495
    %v565 = vsel %vm561, 0.0, %v496
    %v566 = vsel %vm562, 0.0, %v497
    %v567 = vsel %vm563, 0.0, %v498
    %v568 = vpack.c.bf16 %v557, %v556
    %v569 = vpack.c.bf16 %v484, %v483
    %v570 = vpack.c.bf16 %v565, %v564
    %v571 = vpack.c.bf16 %v559, %v558
    %v572 = vpack.c.bf16 %v486, %v485
    %v573 = vpack.c.bf16 %v567, %v566
    %v574 = vld [vmem:[#allocation8] sm:$0xf]
    %v575 = vld [vmem:[#allocation8 + $0x4] sm:$0xf]
    %v576 = vld [vmem:[#allocation8 + $0x8] sm:$0xf]
    %v577 = vld [vmem:[#allocation8 + $0xc] sm:$0xf]
    %v578 = vld [vmem:[#allocation8 + $0x10] sm:$0xf]
    %v579 = vld [vmem:[#allocation8 + $0x14] sm:$0xf]
    %v580 = vld [vmem:[#allocation8 + $0x18] sm:$0xf]
    %v581 = vld [vmem:[#allocation8 + $0x1c] sm:$0xf]
    %v582 = vld [vmem:[#allocation8 + $0x20] sm:$0xf]
    %v583 = vld [vmem:[#allocation8 + $0x24] sm:$0xf]
    %v584 = vld [vmem:[#allocation8 + $0x28] sm:$0xf]
    %v585 = vld [vmem:[#allocation8 + $0x2c] sm:$0xf]
    %v586 = vld [vmem:[#allocation8 + $0x30] sm:$0xf]
    %v587 = vld [vmem:[#allocation8 + $0x34] sm:$0xf]
    %v588 = vld [vmem:[#allocation8 + $0x38] sm:$0xf]
    %v589 = vld [vmem:[#allocation8 + $0x3c] sm:$0xf]
    %v590 = vld [vmem:[#allocation8 + $0x40] sm:$0xf]
    %v591 = vld [vmem:[#allocation8 + $0x44] sm:$0xf]
    %v592 = vld [vmem:[#allocation8 + $0x48] sm:$0xf]
    %v593 = vld [vmem:[#allocation8 + $0x4c] sm:$0xf]
    %v594 = vld [vmem:[#allocation8 + $0x50] sm:$0xf]
    %v595 = vld [vmem:[#allocation8 + $0x54] sm:$0xf]
    %v596 = vld [vmem:[#allocation8 + $0x58] sm:$0xf]
    %v597 = vld [vmem:[#allocation8 + $0x5c] sm:$0xf]
    %v598 = vld [vmem:[#allocation8 + $0x60] sm:$0xf]
    %v599 = vld [vmem:[#allocation8 + $0x64] sm:$0xf]
    %v600 = vld [vmem:[#allocation8 + $0x68] sm:$0xf]
    %v601 = vld [vmem:[#allocation8 + $0x6c] sm:$0xf]
    %v602 = vld [vmem:[#allocation8 + $0x70] sm:$0xf]
    %v603 = vld [vmem:[#allocation8 + $0x74] sm:$0xf]
    %v604 = vld [vmem:[#allocation8 + $0x78] sm:$0xf]
    %v605 = vld [vmem:[#allocation8 + $0x7c] sm:$0xf]
    %v606 = vld [vmem:[#allocation8 + $0x80] sm:$0xf]
    %v607 = vld [vmem:[#allocation8 + $0x84] sm:$0xf]
    %v608 = vld [vmem:[#allocation8 + $0x88] sm:$0xf]
    %v609 = vld [vmem:[#allocation8 + $0x8c] sm:$0xf]
    %v610 = vld [vmem:[#allocation8 + $0x90] sm:$0xf]
    %v611 = vld [vmem:[#allocation8 + $0x94] sm:$0xf]
    %v612 = vld [vmem:[#allocation8 + $0x98] sm:$0xf]
    %v613 = vld [vmem:[#allocation8 + $0x9c] sm:$0xf]
    %v614 = vld [vmem:[#allocation8 + $0xa0] sm:$0xf]
    %v615 = vld [vmem:[#allocation8 + $0xa4] sm:$0xf]
    %v616 = vld [vmem:[#allocation8 + $0xa8] sm:$0xf]
    %v617 = vld [vmem:[#allocation8 + $0xac] sm:$0xf]
    %v618 = vld [vmem:[#allocation8 + $0xb0] sm:$0xf]
    %v619 = vld [vmem:[#allocation8 + $0xb4] sm:$0xf]
    %v620 = vld [vmem:[#allocation8 + $0xb8] sm:$0xf]
    %v621 = vld [vmem:[#allocation8 + $0xbc] sm:$0xf]
    %v670 = vunpack.c.l.b16 %v574
    %v671 = vunpack.c.l.b16 %v575
    %v672 = vunpack.c.l.b16 %v576
    %v673 = vunpack.c.l.b16 %v577
    %v674 = vunpack.c.l.b16 %v578
    %v675 = vunpack.c.l.b16 %v579
    %v676 = vunpack.c.l.b16 %v580
    %v677 = vunpack.c.l.b16 %v581
    %v678 = vunpack.c.l.b16 %v582
    %v679 = vunpack.c.l.b16 %v583
    %v680 = vunpack.c.l.b16 %v584
    %v681 = vunpack.c.l.b16 %v585
    %v682 = vunpack.c.l.b16 %v586
    %v683 = vunpack.c.l.b16 %v587
    %v684 = vunpack.c.l.b16 %v588
    %v685 = vunpack.c.l.b16 %v589
    %v686 = vunpack.c.l.b16 %v590
    %v687 = vunpack.c.l.b16 %v591
    %v688 = vunpack.c.l.b16 %v592
    %v689 = vunpack.c.l.b16 %v593
    %v690 = vunpack.c.l.b16 %v594
    %v691 = vunpack.c.l.b16 %v595
    %v692 = vunpack.c.l.b16 %v596
    %v693 = vunpack.c.l.b16 %v597
    %v694 = vunpack.c.l.b16 %v598
    %v695 = vunpack.c.l.b16 %v599
    %v696 = vunpack.c.l.b16 %v600
    %v697 = vunpack.c.l.b16 %v601
    %v698 = vunpack.c.l.b16 %v602
    %v699 = vunpack.c.l.b16 %v603
    %v700 = vunpack.c.l.b16 %v604
    %v701 = vunpack.c.l.b16 %v605
    %v702 = vunpack.c.l.b16 %v606
    %v703 = vunpack.c.l.b16 %v607
    %v704 = vunpack.c.l.b16 %v608
    %v705 = vunpack.c.l.b16 %v609
    %v706 = vunpack.c.l.b16 %v610
    %v707 = vunpack.c.l.b16 %v611
    %v708 = vunpack.c.l.b16 %v612
    %v709 = vunpack.c.l.b16 %v613
    %v710 = vunpack.c.l.b16 %v614
    %v711 = vunpack.c.l.b16 %v615
    %v712 = vunpack.c.l.b16 %v616
    %v713 = vunpack.c.l.b16 %v617
    %v714 = vunpack.c.l.b16 %v618
    %v715 = vunpack.c.l.b16 %v619
    %v716 = vunpack.c.l.b16 %v620
    %v717 = vunpack.c.l.b16 %v621
    %v718 = vpack.c.b16 %v671, %v670
    %v719 = vpack.c.b16 %v673, %v672
    %v720 = vpack.c.b16 %v675, %v674
    %v721 = vpack.c.b16 %v677, %v676
    %v722 = vpack.c.b16 %v679, %v678
    %v723 = vpack.c.b16 %v681, %v680
    %v724 = vpack.c.b16 %v683, %v682
    %v725 = vpack.c.b16 %v685, %v684
    %v726 = vpack.c.b16 %v687, %v686
    %v727 = vpack.c.b16 %v689, %v688
    %v728 = vpack.c.b16 %v691, %v690
    %v729 = vpack.c.b16 %v693, %v692
    %v730 = vpack.c.b16 %v695, %v694
    %v731 = vpack.c.b16 %v697, %v696
    %v732 = vpack.c.b16 %v699, %v698
    %v733 = vpack.c.b16 %v701, %v700
    %v734 = vpack.c.b16 %v703, %v702
    %v735 = vpack.c.b16 %v705, %v704
    %v736 = vpack.c.b16 %v707, %v706
    %v737 = vpack.c.b16 %v709, %v708
    %v738 = vpack.c.b16 %v711, %v710
    %v739 = vpack.c.b16 %v713, %v712
    %v740 = vpack.c.b16 %v715, %v714
    %v741 = vpack.c.b16 %v717, %v716
    %766 = vmatprep.subr.bf16.mxu0 0
    %767 = vmatpush1.bf16.msra.mxu0 %v718
    %768 = vmatprep.subr.bf16.mxu0 0
    %769 = vmatpush1.bf16.msra.mxu0 %v719
    %770 = vmatprep.subr.bf16.mxu0 0
    %771 = vmatpush1.bf16.msra.mxu0 %v720
    %772 = vmatprep.subr.bf16.mxu0 0
    %773 = vmatpush1.bf16.msra.mxu0 %v721
    %774 = vmatprep.subr.bf16.mxu0 0
    %775 = vmatpush1.bf16.msra.mxu0 %v722
    %776 = vmatprep.subr.bf16.mxu0 0
    %777 = vmatpush1.bf16.msra.mxu0 %v723
    %778 = vmatprep.subr.bf16.mxu0 0
    %779 = vmatpush1.bf16.msra.mxu0 %v724
    %780 = vmatprep.subr.bf16.mxu0 0
    %781 = vmatpush1.bf16.msra.mxu0 %v725
    %782 = vmatprep.subr.bf16.mxu0 0
    %783 = vmatpush1.bf16.msra.mxu0 %v726
    %784 = vmatprep.subr.bf16.mxu0 0
    %785 = vmatpush1.bf16.msra.mxu0 %v727
    %786 = vmatprep.subr.bf16.mxu0 0
    %787 = vmatpush1.bf16.msra.mxu0 %v728
    %788 = vmatprep.subr.bf16.mxu0 0
    %789 = vmatpush1.bf16.msra.mxu0 %v729
    %790 = vmatprep.subr.bf16.mxu0 0
    %791 = vmatpush1.bf16.msra.mxu0 %v730
    %792 = vmatprep.subr.bf16.mxu0 0
    %793 = vmatpush1.bf16.msra.mxu0 %v731
    %794 = vmatprep.subr.bf16.mxu0 0
    %795 = vmatpush1.bf16.msra.mxu0 %v732
    %796 = vmatprep.subr.bf16.mxu0 0
    %797 = vmatpush1.bf16.msra.mxu0 %v733
    %798 = vmatprep.mubr.bf16.mxu0 %v569
    %799 = vmatmul.mubr.bf16.gmra.mrb[0].mxu0 %v568
    %v800 = vpop.f32.mrb[0].mxu0
    %v801 = vadd.f32 0.0, %v800
    %v802 = vpop.f32.mrb[0].mxu0
    %v803 = vpop.f32.mrb[0].mxu0
    %v804 = vadd.f32 0.0, %v803
    %v805 = vpop.f32.mrb[0].mxu0
    %806 = vmatprep.mubr.bf16.mxu0 %v572
    %807 = vmatmul.mubr.bf16.gmra.mrb[0].mxu0 %v571
    %v808 = vpop.f32.mrb[0].mxu0
    %v809 = vadd.f32 0.0, %v808
    %v810 = vpop.f32.mrb[0].mxu0
    %v811 = vpop.f32.mrb[0].mxu0
    %v812 = vadd.f32 0.0, %v811
    %v813 = vpop.f32.mrb[0].mxu0
    %814 = vdwg.mxu0
    %815 = vmatprep.subr.bf16.mxu0 0
    %816 = vmatpush1.bf16.msra.mxu0 %v734
    %817 = vmatprep.subr.bf16.mxu0 0
    %818 = vmatpush1.bf16.msra.mxu0 %v735
    %819 = vmatprep.subr.bf16.mxu0 0
    %820 = vmatpush1.bf16.msra.mxu0 %v736
    %821 = vmatprep.subr.bf16.mxu0 0
    %822 = vmatpush1.bf16.msra.mxu0 %v737
    %823 = vmatprep.subr.bf16.mxu0 0
    %824 = vmatpush1.bf16.msra.mxu0 %v738
    %825 = vmatprep.subr.bf16.mxu0 0
    %826 = vmatpush1.bf16.msra.mxu0 %v739
    %827 = vmatprep.subr.bf16.mxu0 0
    %828 = vmatpush1.bf16.msra.mxu0 %v740
    %829 = vmatprep.subr.bf16.mxu0 0
    %830 = vmatpush1.bf16.msra.mxu0 %v741
    %831 = vmatprep.subr.bf16.mxu0 0
    %832 = vmatpush1.bf16.msra.mxu0 0
    %833 = vmatprep.subr.bf16.mxu0 0
    %834 = vmatpush1.bf16.msra.mxu0 0
    %835 = vmatprep.subr.bf16.mxu0 0
    %836 = vmatpush1.bf16.msra.mxu0 0
    %837 = vmatprep.subr.bf16.mxu0 0
    %838 = vmatpush1.bf16.msra.mxu0 0
    %839 = vmatprep.subr.bf16.mxu0 0
    %840 = vmatpush1.bf16.msra.mxu0 0
    %841 = vmatprep.subr.bf16.mxu0 0
    %842 = vmatpush1.bf16.msra.mxu0 0
    %843 = vmatprep.subr.bf16.mxu0 0
    %844 = vmatpush1.bf16.msra.mxu0 0
    %845 = vmatprep.subr.bf16.mxu0 0
    %846 = vmatpush1.bf16.msra.mxu0 0
    %847 = vmatprep.mubr.bf16.mxu0 0
    %848 = vmatmul.mubr.bf16.gmra.mrb[0].mxu0 %v570
    %v849 = vpop.f32.mrb[0].mxu0
    %v850 = vadd.f32 %v801, %v849
    %v851 = vpop.f32.mrb[0].mxu0
    %v852 = vpop.f32.mrb[0].mxu0
    %v853 = vadd.f32 %v804, %v852
    %v854 = vpop.f32.mrb[0].mxu0
    %855 = vmatprep.mubr.bf16.mxu0 0
    %856 = vmatmul.mubr.bf16.gmra.mrb[0].mxu0 %v573
    %v857 = vpop.f32.mrb[0].mxu0
    %v858 = vadd.f32 %v809, %v857
    %v859 = vpop.f32.mrb[0].mxu0
    %v860 = vpop.f32.mrb[0].mxu0
    %v861 = vadd.f32 %v812, %v860
    %v862 = vpop.f32.mrb[0].mxu0
    %863 = vdwg.mxu0
    %v864 = vld [vmem:[%s5] sm:$0x1]
    %v865 = vld [vmem:[%s6] sm:$0x1]
    %v866 = vadd.f32 %v850, %v853
    %v867 = vadd.f32 %v866, %v858
    %v868 = vadd.f32 %v867, %v861
    %v869 = vrot.slane %v868, 4
    %v870 = vadd.f32 %v868, %v869
    %v871 = vrot.slane %v870, 2
    %v872 = vadd.f32 %v870, %v871
    %v873 = vrot.slane %v872, 1
    %v874 = vadd.f32 %v872, %v873
    %875 = vmatprep.subr.mxu0 0.0
    %876 = vmatpush1.msra.mxu0 %v86
    %877 = vmatprep.subr.mxu0 0.0
    %878 = vmatpush1.msra.mxu0 %v87
    %879 = vmatprep.subr.mxu0 0.0
    %880 = vmatpush1.msra.mxu0 %v88
    %881 = vmatprep.subr.mxu0 0.0
    %882 = vmatpush1.msra.mxu0 %v89
    %883 = vmatprep.subr.mxu0 0.0
    %884 = vmatpush1.msra.mxu0 %v90
    %885 = vmatprep.subr.mxu0 0.0
    %886 = vmatpush1.msra.mxu0 %v91
    %887 = vmatprep.subr.mxu0 0.0
    %888 = vmatpush1.msra.mxu0 %v92
    %889 = vmatprep.subr.mxu0 0.0
    %890 = vmatpush1.msra.mxu0 %v93
    %891 = vmatprep.subr.mxu0 0.0
    %892 = vmatpush1.msra.mxu0 %v94
    %893 = vmatprep.subr.mxu0 0.0
    %894 = vmatpush1.msra.mxu0 %v95
    %895 = vmatprep.subr.mxu0 0.0
    %896 = vmatpush1.msra.mxu0 %v96
    %897 = vmatprep.subr.mxu0 0.0
    %898 = vmatpush1.msra.mxu0 %v97
    %899 = vmatprep.subr.mxu0 0.0
    %900 = vmatpush1.msra.mxu0 %v98
    %901 = vmatprep.subr.mxu0 0.0
    %902 = vmatpush1.msra.mxu0 %v99
    %903 = vmatprep.subr.mxu0 0.0
    %904 = vmatpush1.msra.mxu0 %v100
    %905 = vmatprep.subr.mxu0 0.0
    %906 = vmatpush1.msra.mxu0 %v101
    %907 = vmatprep.subr.mxu0 0.0
    %908 = vmatpush1.msra.mxu0 0.0
    %909 = vmatprep.subr.mxu0 0.0
    %910 = vmatpush1.msra.mxu0 0.0
    %911 = vmatprep.subr.mxu0 0.0
    %912 = vmatpush1.msra.mxu0 0.0
    %913 = vmatprep.subr.mxu0 0.0
    %914 = vmatpush1.msra.mxu0 0.0
    %915 = vmatprep.subr.mxu0 0.0
    %916 = vmatpush1.msra.mxu0 0.0
    %917 = vmatprep.subr.mxu0 0.0
    %918 = vmatpush1.msra.mxu0 0.0
    %919 = vmatprep.subr.mxu0 0.0
    %920 = vmatpush1.msra.mxu0 0.0
    %921 = vmatprep.subr.mxu0 0.0
    %922 = vmatpush1.msra.mxu0 0.0
    %923 = vmatprep.subr.mxu0 0.0
    %924 = vmatpush1.msra.mxu0 0.0
    %925 = vmatprep.subr.mxu0 0.0
    %926 = vmatpush1.msra.mxu0 0.0
    %927 = vmatprep.subr.mxu0 0.0
    %928 = vmatpush1.msra.mxu0 0.0
    %929 = vmatprep.subr.mxu0 0.0
    %930 = vmatpush1.msra.mxu0 0.0
    %931 = vmatprep.subr.mxu0 0.0
    %932 = vmatpush1.msra.mxu0 0.0
    %933 = vmatprep.subr.mxu0 0.0
    %934 = vmatpush1.msra.mxu0 0.0
    %935 = vmatprep.subr.mxu0 0.0
    %936 = vmatpush1.msra.mxu0 0.0
    %937 = vmatprep.subr.mxu0 0.0
    %938 = vmatpush1.msra.mxu0 0.0
    %939 = vmatprep.mubr.f32.mxu0 0.0
    %940 = vmatmul.mubr.f32.gmra.mrb[0].mxu0 %v874
    %v941 = vpop.f32.mrb[0].mxu0
    %v942 = vadd.f32 0.0, %v941
    %v943 = vpop.f32.mrb[0].mxu0
    %944 = vdwg.mxu0
    %v945 = vmul.f32 %v850, %v850
    %v946 = vmul.f32 %v853, %v853
    %v947 = vmul.f32 %v858, %v858
    %v948 = vmul.f32 %v861, %v861
    %v949 = vadd.f32 %v945, %v946
    %v950 = vadd.f32 %v949, %v947
    %v951 = vadd.f32 %v950, %v948
    %v952 = vrot.slane %v951, 4
    %v953 = vadd.f32 %v951, %v952
    %v954 = vrot.slane %v953, 2
    %v955 = vadd.f32 %v953, %v954
    %v956 = vrot.slane %v955, 1
    %v957 = vadd.f32 %v955, %v956
    %958 = vmatprep.subr.mxu0 0.0
    %959 = vmatpush1.msra.mxu0 %v86
    %960 = vmatprep.subr.mxu0 0.0
    %961 = vmatpush1.msra.mxu0 %v87
    %962 = vmatprep.subr.mxu0 0.0
    %963 = vmatpush1.msra.mxu0 %v88
    %964 = vmatprep.subr.mxu0 0.0
    %965 = vmatpush1.msra.mxu0 %v89
    %966 = vmatprep.subr.mxu0 0.0
    %967 = vmatpush1.msra.mxu0 %v90
    %968 = vmatprep.subr.mxu0 0.0
    %969 = vmatpush1.msra.mxu0 %v91
    %970 = vmatprep.subr.mxu0 0.0
    %971 = vmatpush1.msra.mxu0 %v92
    %972 = vmatprep.subr.mxu0 0.0
    %973 = vmatpush1.msra.mxu0 %v93
    %974 = vmatprep.subr.mxu0 0.0
    %975 = vmatpush1.msra.mxu0 %v94
    %976 = vmatprep.subr.mxu0 0.0
    %977 = vmatpush1.msra.mxu0 %v95
    %978 = vmatprep.subr.mxu0 0.0
    %979 = vmatpush1.msra.mxu0 %v96
    %980 = vmatprep.subr.mxu0 0.0
    %981 = vmatpush1.msra.mxu0 %v97
    %982 = vmatprep.subr.mxu0 0.0
    %983 = vmatpush1.msra.mxu0 %v98
    %984 = vmatprep.subr.mxu0 0.0
    %985 = vmatpush1.msra.mxu0 %v99
    %986 = vmatprep.subr.mxu0 0.0
    %987 = vmatpush1.msra.mxu0 %v100
    %988 = vmatprep.subr.mxu0 0.0
    %989 = vmatpush1.msra.mxu0 %v101
    %990 = vmatprep.subr.mxu0 0.0
    %991 = vmatpush1.msra.mxu0 0.0
    %992 = vmatprep.subr.mxu0 0.0
    %993 = vmatpush1.msra.mxu0 0.0
    %994 = vmatprep.subr.mxu0 0.0
    %995 = vmatpush1.msra.mxu0 0.0
    %996 = vmatprep.subr.mxu0 0.0
    %997 = vmatpush1.msra.mxu0 0.0
    %998 = vmatprep.subr.mxu0 0.0
    %999 = vmatpush1.msra.mxu0 0.0
    %1000 = vmatprep.subr.mxu0 0.0
    %1001 = vmatpush1.msra.mxu0 0.0
    %1002 = vmatprep.subr.mxu0 0.0
    %1003 = vmatpush1.msra.mxu0 0.0
    %1004 = vmatprep.subr.mxu0 0.0
    %1005 = vmatpush1.msra.mxu0 0.0
    %1006 = vmatprep.subr.mxu0 0.0
    %1007 = vmatpush1.msra.mxu0 0.0
    %1008 = vmatprep.subr.mxu0 0.0
    %1009 = vmatpush1.msra.mxu0 0.0
    %1010 = vmatprep.subr.mxu0 0.0
    %1011 = vmatpush1.msra.mxu0 0.0
    %1012 = vmatprep.subr.mxu0 0.0
    %1013 = vmatpush1.msra.mxu0 0.0
    %1014 = vmatprep.subr.mxu0 0.0
    %1015 = vmatpush1.msra.mxu0 0.0
    %1016 = vmatprep.subr.mxu0 0.0
    %1017 = vmatpush1.msra.mxu0 0.0
    %1018 = vmatprep.subr.mxu0 0.0
    %1019 = vmatpush1.msra.mxu0 0.0
    %1020 = vmatprep.subr.mxu0 0.0
    %1021 = vmatpush1.msra.mxu0 0.0
    %1022 = vmatprep.mubr.f32.mxu0 0.0
    %1023 = vmatmul.mubr.f32.gmra.mrb[0].mxu0 %v957
    %v1024 = vpop.f32.mrb[0].mxu0
    %v1025 = vadd.f32 0.0, %v1024
    %v1026 = vpop.f32.mrb[0].mxu0
    %1027 = vdwg.mxu0
    %v1028 = vmul.f32 %v942, %v942
    %v1029 = vsub.f32 %v1025, %v1028
    %v1030 = vadd.f32 %v1029, 1e-05
    %v1031 = vrsqrt.pop %v1030
    %v1032 = vmul.f32 %v864, %v1031
    %v1033 = vmul.f32 %v942, %v1032
    %v1034 = vsub.f32 %v865, %v1033
    %v1036 = vlaneseq
    %v1037 = vshrl.u32 %v1036, 7
    %v1038 = vsub.s32 0, %v1037
    %v1039 = vrot.slane %v1032, %v1038
    %v1041 = vmul.f32 %v850, %v1039
    %v1042 = vmul.f32 %v853, %v1039
    %v1043 = vmul.f32 %v858, %v1039
    %v1044 = vmul.f32 %v861, %v1039
    %v1046 = vlaneseq
    %v1047 = vshrl.u32 %v1046, 7
    %v1048 = vsub.s32 0, %v1047
    %v1049 = vrot.slane %v1034, %v1048
    %v1051 = vadd.f32 %v1041, %v1049
    %v1052 = vadd.f32 %v1042, %v1049
    %v1053 = vadd.f32 %v1043, %v1049
    %v1054 = vadd.f32 %v1044, %v1049
    %v1055 = vmax.f32 %v1051, 0.0
    %v1056 = vmax.f32 %v1052, 0.0
    %v1057 = vmax.f32 %v1053, 0.0
    %v1058 = vmax.f32 %v1054, 0.0
    %1059 = vst [vmem:[#allocation11] sm:$0xff] %v1055
    %1060 = vst [vmem:[#allocation11 + $0x8] sm:$0xff] %v1056
    %1061 = vst [vmem:[#allocation11 + $0x10] sm:$0xff] %v1057
    %1062 = vst [vmem:[#allocation11 + $0x18] sm:$0xff] %v1058
    // Predicated region
    $region50: #{tpu_custom_call.1} parent=1 // pred_check
      _
    $region51: #{tpu_custom_call.1} parent=1 // pred_check_branch
      %1064 = sbr.rel (0) target = $region53
    $region52: #{tpu_custom_call.1} parent=1 // pred_region
      %s1066 = ssub.s32 512, 512
      %1067 = vsyncadd [#allocation5], %s1066
      %s1068 = sshll.u32 [#allocation11], 4
      %s1069 = int_to_ptr.vmem [resolvable:$true] %s1068
      %1074 = dma.vmem_to_hbm [thread:$0]  %s1069, 512, %s8, [#allocation5], 128, 128, 8
    $region53: #{tpu_custom_call.1} parent=1 // pred_fallthru
      _
    // Predicated region
    $region54: #{tpu_custom_call.1} parent=1 // pred_check
      _
    $region55: #{tpu_custom_call.1} parent=1 // pred_check_branch
      %1076 = sbr.rel (0) target = $region57
    $region56: #{tpu_custom_call.1} parent=1 // pred_region
      %1077 = dma.done [#allocation5], 512
    $region57: #{tpu_custom_call.1} parent=1 // pred_fallthru
      _
    %1078 = vsyncpa [#allocation4], 1
    %1079 = vsyncpa [#allocation7], 1
    %1080 = vsyncpa [#allocation10], 1
    %1081 = vsyncpa [#allocation5], 1

</llo_original>
